<compile_context>
chip_gen: v7x
topology: tpu7x:2x2x1
jax: 0.10.0
libtpu: 0.0.40
codegen_flags: <defaults>
</compile_context>

<pallas_src>
import functools

import jax
import jax.numpy as jnp
from jax import lax
from jax.experimental import pallas as pl
from jax.experimental.pallas import tpu as pltpu


def _self_output_kernel(x_ref, wt_ref, b_ref, resid_ref, gamma_ref, beta_ref,
                        out_ref, h_ref, *, eps: float):
    """Skewed pipeline body.  Grid has (num_row_blocks + 1) steps.

    Step i:
      stage A (i < last step): matmul of row-tile i        -> h_ref[i % 2]
      stage B (i > 0):        epilogue of row-tile i-1 from  h_ref[(i-1) % 2]
    The stages touch different scratch slots, so MXU work for tile i can
    overlap with the VPU/XLU/EUP epilogue for tile i-1.
    """
    i = pl.program_id(0)
    slot = lax.rem(i, 2)
    prev_slot = 1 - slot

    @pl.when(i < pl.num_programs(0) - 1)
    def _matmul():
        # Dense: x @ W^T (wt_ref already holds W^T); f32 accumulation on MXU.
        h = jnp.dot(x_ref[...], wt_ref[...], preferred_element_type=jnp.float32)

        @pl.when(slot == 0)
        def _():
            h_ref[0] = h

        @pl.when(slot == 1)
        def _():
            h_ref[1] = h

    # TODO(synk): dropout is identity (eval mode); training-mode dropout would
    # need pltpu.prng_seed / prng_random_bits and is omitted.

    @pl.when(i > 0)
    def _epilogue():
        # Fused bias + residual add, one-pass LayerNorm statistics, single affine.
        z = (h_ref[prev_slot]
             + b_ref[...].astype(jnp.float32)
             + resid_ref[...].astype(jnp.float32))                 # (tm, H) f32
        mean = jnp.mean(z, axis=-1, keepdims=True)
        mean_sq = jnp.mean(z * z, axis=-1, keepdims=True)
        var = mean_sq - mean * mean
        inv = lax.rsqrt(var + eps)
        scale = gamma_ref[...].astype(jnp.float32) * inv            # (tm, H)
        out_ref[...] = ((z - mean) * scale
                        + beta_ref[...].astype(jnp.float32)).astype(out_ref.dtype)


def _tpu_defaults():
    try:
        vmem_cap = pltpu.get_tpu_info().vmem_capacity_bytes
    except Exception:
        vmem_cap = 64 * 1024 * 1024
    # 128 MiB parts (v5e/v6e): larger tiles amortize the ~0.35us/step overhead.
    block_m = 1024 if vmem_cap >= 96 * 1024 * 1024 else 512
    return block_m, vmem_cap


def iqm_self_output(hidden_states, input_tensor, weight, bias, gamma, beta,
                    *, eps: float = 1e-12, block_m=None,
                    cast_inputs_to_bf16: bool = False):
    """hidden_states, input_tensor: (B, S, H); weight: (H, H) torch-Linear
    layout (out, in); bias / gamma / beta: (H,)."""
    B, S, H = hidden_states.shape
    M = B * S
    out_dtype = hidden_states.dtype

    default_block_m, vmem_cap = _tpu_defaults()
    if block_m is None:
        block_m = default_block_m

    x2 = hidden_states.reshape(M, H)
    r2 = input_tensor.reshape(M, H)
    wt = weight.T                     # (H_in, H_out): transpose once, outside kernel
    if cast_inputs_to_bf16 and x2.dtype == jnp.float32:
        # v5e-style: bf16 MXU operands, f32 accumulation + f32 LN stats.
        x2 = x2.astype(jnp.bfloat16)
        r2 = r2.astype(jnp.bfloat16)
        wt = wt.astype(jnp.bfloat16)
    b2 = bias.reshape(1, H)
    g2 = gamma.reshape(1, H)
    be2 = beta.reshape(1, H)

    # Row tiling.  No padding copies: the last block may be ragged; Pallas masks
    # OOB writes and per-row LN keeps garbage rows isolated.
    tm = min(block_m, M)
    if tm < M:
        tm = (tm // 8) * 8                      # sublane-aligned streamed tile
    elif M >= 512:
        # At least two row blocks so the skewed epilogue actually overlaps with
        # the next tile's matmul.
        tm = ((M // 2) + 7) // 8 * 8
    grid_m = pl.cdiv(M, tm)
    last = grid_m - 1

    # VMEM budget from the real working set (double-buffered streamed tiles,
    # resident W^T/params, (2, tm, H) f32 scratch) + ~30% headroom, kept below
    # physical capacity (64 MiB/TC on v7x).
    streamed = 2 * tm * H * (x2.dtype.itemsize + r2.dtype.itemsize
                             + jnp.dtype(out_dtype).itemsize)
    resident = 2 * (H * H * wt.dtype.itemsize + 3 * H * 4)
    scratch = 2 * tm * H * 4
    vmem_limit = int((streamed + resident + scratch) * 1.3) + (4 << 20)
    vmem_limit = max(32 << 20, min(vmem_limit, vmem_cap - (8 << 20)))
    # TODO(synk): on v7x, single-buffering the resident W^T/bias/gamma/beta via
    # pipeline_mode=pl.Buffered(1) would save another H*H*itemsize of VMEM.

    kernel = functools.partial(_self_output_kernel, eps=eps)

    out = pl.pallas_call(
        kernel,
        out_shape=jax.ShapeDtypeStruct((M, H), out_dtype),
        grid_spec=pltpu.PrefetchScalarGridSpec(
            num_scalar_prefetch=0,
            grid=(grid_m + 1,),                 # +1 flush step for the skewed epilogue
            in_specs=[
                pl.BlockSpec((tm, H), lambda i: (jnp.minimum(i, last), 0)),   # x (stage A)
                pl.BlockSpec((H, H), lambda i: (0, 0)),                       # W^T (resident)
                pl.BlockSpec((1, H), lambda i: (0, 0)),                       # bias
                pl.BlockSpec((tm, H), lambda i: (jnp.maximum(i - 1, 0), 0)),  # residual (stage B)
                pl.BlockSpec((1, H), lambda i: (0, 0)),                       # LN gamma
                pl.BlockSpec((1, H), lambda i: (0, 0)),                       # LN beta
            ],
            out_specs=pl.BlockSpec((tm, H), lambda i: (jnp.maximum(i - 1, 0), 0)),
            scratch_shapes=[pltpu.VMEM((2, tm, H), jnp.float32)],
        ),
        compiler_params=pltpu.CompilerParams(
            # Scratch carries state between consecutive steps -> "arbitrary".
            # TODO(synk): a 2-level grid (outer "parallel" over row groups) would
            # additionally recover v7x dual-TensorCore sharding on top of the skew.
            dimension_semantics=("arbitrary",),
            vmem_limit_bytes=vmem_limit,
        ),
    )(x2, wt, b2, r2, g2, be2)

    return out.reshape(B, S, H)


def _reference(hidden_states, input_tensor, weight, bias, gamma, beta, eps=1e-12):
    h = jnp.einsum("bsh,oh->bso", hidden_states, weight) + bias
    z = h + input_tensor
    mean = jnp.mean(z, axis=-1, keepdims=True)
    var = jnp.mean((z - mean) ** 2, axis=-1, keepdims=True)
    return (z - mean) / jnp.sqrt(var + eps) * gamma + beta


def _make_inputs(key, B, S, H):
    k1, k2, k3, k4 = jax.random.split(key, 4)
    hidden_states = jax.random.normal(k1, (B, S, H), dtype=jnp.float32)
    input_tensor = jax.random.normal(k2, (B, S, H), dtype=jnp.float32)
    bound = 1.0 / (H ** 0.5)
    weight = jax.random.uniform(k3, (H, H), minval=-bound, maxval=bound,
                                dtype=jnp.float32)
    bias = jax.random.uniform(k4, (H,), minval=-bound, maxval=bound,
                              dtype=jnp.float32)
    gamma = jnp.ones((H,), dtype=jnp.float32)
    beta = jnp.zeros((H,), dtype=jnp.float32)
    return hidden_states, input_tensor, weight, bias, gamma, beta


if __name__ == "__main__":
    eps = 1e-12
    key = jax.random.PRNGKey(0)
    k_small, k_big = jax.random.split(key)

    # Small shape consistent with the module (single row block, H < 128 lanes).
    B, S, H = 2, 8, 32
    hs, it, w, b, g, be = _make_inputs(k_small, B, S, H)
    out = iqm_self_output(hs, it, w, b, g, be, eps=eps)
    out = jax.block_until_ready(out)
    ref = _reference(hs, it, w, b, g, be, eps=eps)
    assert out.shape == (B, S, H)
    assert jnp.allclose(out, ref, atol=2e-4, rtol=2e-4), "mismatch vs reference (small)"

    # Multi-block + ragged-last-block path: exercises the skewed pipeline
    # (5 row tiles of 128 rows, M=600 so the last tile is partially masked).
    B2, S2, H2 = 2, 300, 128
    hs2, it2, w2, b2_, g2, be2 = _make_inputs(k_big, B2, S2, H2)
    out2 = iqm_self_output(hs2, it2, w2, b2_, g2, be2, eps=eps, block_m=128)
    out2 = jax.block_until_ready(out2)
    ref2 = _reference(hs2, it2, w2, b2_, g2, be2, eps=eps)
    assert out2.shape == (B2, S2, H2)
    assert jnp.allclose(out2, ref2, atol=1e-2, rtol=1e-2), "mismatch vs reference (tiled)"

    print("KERNEL_OK")
</pallas_src>

<mosaic_0001>
module attributes {stable_mosaic.version = 11 : i64} {
  func.func @_self_output_kernel(%arg0: i32, %arg1: memref<16x32xf32, #tpu.memory_space<vmem>>, %arg2: memref<32x32xf32, #tpu.memory_space<vmem>>, %arg3: memref<1x32xf32, #tpu.memory_space<vmem>>, %arg4: memref<16x32xf32, #tpu.memory_space<vmem>>, %arg5: memref<1x32xf32, #tpu.memory_space<vmem>>, %arg6: memref<1x32xf32, #tpu.memory_space<vmem>>, %arg7: memref<16x32xf32, #tpu.memory_space<vmem>>, %arg8: memref<2x16x32xf32, #tpu.memory_space<vmem>>) attributes {dimension_semantics = [#tpu.dimension_semantics<arbitrary>], iteration_bounds = array<i64: 2>, scalar_prefetch = 0 : i64, scratch_operands = 1 : i64, tpu.core_type = #tpu.core_type<tc>, window_params = [{transform_indices = @transform_0, window_bounds = array<i64: 16, 32>}, {pipeline_mode = #tpu.pipeline_mode<synchronous>, transform_indices = @transform_1, window_bounds = array<i64: 32, 32>}, {pipeline_mode = #tpu.pipeline_mode<synchronous>, transform_indices = @transform_2, window_bounds = array<i64: 1, 32>}, {transform_indices = @transform_3, window_bounds = array<i64: 16, 32>}, {pipeline_mode = #tpu.pipeline_mode<synchronous>, transform_indices = @transform_4, window_bounds = array<i64: 1, 32>}, {pipeline_mode = #tpu.pipeline_mode<synchronous>, transform_indices = @transform_5, window_bounds = array<i64: 1, 32>}, {transform_indices = @transform_6, window_bounds = array<i64: 16, 32>}]} {
    %c2_i32 = arith.constant 2 : i32
    %0 = arith.remsi %arg0, %c2_i32 : i32
    %c1_i32 = arith.constant 1 : i32
    %1 = arith.subi %c1_i32, %0 : i32
    %c1_i32_0 = arith.constant 1 : i32
    %2 = arith.cmpi slt, %arg0, %c1_i32_0 : i32
    %3 = arith.extui %2 : i1 to i32
    %c0_i32 = arith.constant 0 : i32
    %4 = arith.cmpi ne, %3, %c0_i32 : i32
    scf.if %4 {
      %c0 = arith.constant 0 : index
      %c0_3 = arith.constant 0 : index
      %8 = vector.load %arg1[%c0, %c0_3] : memref<16x32xf32, #tpu.memory_space<vmem>>, vector<16x32xf32>
      %c0_4 = arith.constant 0 : index
      %c0_5 = arith.constant 0 : index
      %9 = vector.load %arg2[%c0_4, %c0_5] : memref<32x32xf32, #tpu.memory_space<vmem>>, vector<32x32xf32>
      %cst = arith.constant dense<0.000000e+00> : vector<16x32xf32>
      %10 = tpu.matmul %8, %9, %cst {dimension_numbers = #tpu.dot_dimension_numbers<[1], [0], [0], [1], [0, 0, 1, 1], [], []>} : vector<16x32xf32>, vector<32x32xf32>, vector<16x32xf32> -> vector<16x32xf32>
      %c0_i32_6 = arith.constant 0 : i32
      %11 = arith.cmpi eq, %0, %c0_i32_6 : i32
      %12 = arith.extui %11 : i1 to i32
      %c0_i32_7 = arith.constant 0 : i32
      %13 = arith.cmpi ne, %12, %c0_i32_7 : i32
      scf.if %13 {
        %c0_10 = arith.constant 0 : index
        %c0_11 = arith.constant 0 : index
        %c0_12 = arith.constant 0 : index
        %17 = vector.load %arg8[%c0_10, %c0_11, %c0_12] : memref<2x16x32xf32, #tpu.memory_space<vmem>>, vector<1x16x32xf32>
        %18 = vector.shape_cast %17 : vector<1x16x32xf32> to vector<16x32xf32>
        %19 = vector.shape_cast %10 : vector<16x32xf32> to vector<1x16x32xf32>
        tpu.vector_store %arg8[%c0_10, %c0_11, %c0_12], %19 {strides = array<i32>} : memref<2x16x32xf32, #tpu.memory_space<vmem>>, vector<1x16x32xf32>,
      } else {
      }
      %c1_i32_8 = arith.constant 1 : i32
      %14 = arith.cmpi eq, %0, %c1_i32_8 : i32
      %15 = arith.extui %14 : i1 to i32
      %c0_i32_9 = arith.constant 0 : i32
      %16 = arith.cmpi ne, %15, %c0_i32_9 : i32
      scf.if %16 {
        %c1 = arith.constant 1 : index
        %c0_10 = arith.constant 0 : index
        %c0_11 = arith.constant 0 : index
        %17 = vector.load %arg8[%c1, %c0_10, %c0_11] : memref<2x16x32xf32, #tpu.memory_space<vmem>>, vector<1x16x32xf32>
        %18 = vector.shape_cast %17 : vector<1x16x32xf32> to vector<16x32xf32>
        %19 = vector.shape_cast %10 : vector<16x32xf32> to vector<1x16x32xf32>
        tpu.vector_store %arg8[%c1, %c0_10, %c0_11], %19 {strides = array<i32>} : memref<2x16x32xf32, #tpu.memory_space<vmem>>, vector<1x16x32xf32>,
      } else {
      }
    } else {
    }
    %c0_i32_1 = arith.constant 0 : i32
    %5 = arith.cmpi sgt, %arg0, %c0_i32_1 : i32
    %6 = arith.extui %5 : i1 to i32
    %c0_i32_2 = arith.constant 0 : i32
    %7 = arith.cmpi ne, %6, %c0_i32_2 : i32
    scf.if %7 {
      %8 = arith.index_cast %1 : i32 to index
      %c0 = arith.constant 0 : index
      %c0_3 = arith.constant 0 : index
      %9 = vector.load %arg8[%8, %c0, %c0_3] : memref<2x16x32xf32, #tpu.memory_space<vmem>>, vector<1x16x32xf32>
      %10 = vector.shape_cast %9 : vector<1x16x32xf32> to vector<16x32xf32>
      %c0_4 = arith.constant 0 : index
      %c0_5 = arith.constant 0 : index
      %11 = vector.load %arg3[%c0_4, %c0_5] : memref<1x32xf32, #tpu.memory_space<vmem>>, vector<1x32xf32>
      %12 = vector.broadcast %11 : vector<1x32xf32> to vector<16x32xf32>
      %13 = arith.addf %10, %12 : vector<16x32xf32>
      %c0_6 = arith.constant 0 : index
      %c0_7 = arith.constant 0 : index
      %14 = vector.load %arg4[%c0_6, %c0_7] : memref<16x32xf32, #tpu.memory_space<vmem>>, vector<16x32xf32>
      %15 = arith.addf %13, %14 : vector<16x32xf32>
      %cst = arith.constant dense<0.000000e+00> : vector<16xf32>
      %16 = vector.multi_reduction <add>, %15, %cst [1] : vector<16x32xf32> to vector<16xf32>
      %17 = vector.shape_cast %16 : vector<16xf32> to vector<16x1xf32>
      %cst_8 = arith.constant 3.200000e+01 : f32
      %18 = vector.broadcast %cst_8 : f32 to vector<16x1xf32>
      %19 = arith.divf %17, %18 : vector<16x1xf32>
      %20 = arith.mulf %15, %15 : vector<16x32xf32>
      %cst_9 = arith.constant dense<0.000000e+00> : vector<16xf32>
      %21 = vector.multi_reduction <add>, %20, %cst_9 [1] : vector<16x32xf32> to vector<16xf32>
      %22 = vector.shape_cast %21 : vector<16xf32> to vector<16x1xf32>
      %cst_10 = arith.constant 3.200000e+01 : f32
      %23 = vector.broadcast %cst_10 : f32 to vector<16x1xf32>
      %24 = arith.divf %22, %23 : vector<16x1xf32>
      %25 = arith.mulf %19, %19 : vector<16x1xf32>
      %26 = arith.subf %24, %25 : vector<16x1xf32>
      %cst_11 = arith.constant 9.99999996E-13 : f32
      %27 = vector.broadcast %cst_11 : f32 to vector<16x1xf32>
      %28 = arith.addf %26, %27 : vector<16x1xf32>
      %29 = math.rsqrt %28 : vector<16x1xf32>
      %c0_12 = arith.constant 0 : index
      %c0_13 = arith.constant 0 : index
      %30 = vector.load %arg5[%c0_12, %c0_13] : memref<1x32xf32, #tpu.memory_space<vmem>>, vector<1x32xf32>
      %31 = vector.broadcast %30 : vector<1x32xf32> to vector<16x32xf32>
      %32 = vector.broadcast %29 : vector<16x1xf32> to vector<16x32xf32>
      %33 = arith.mulf %31, %32 : vector<16x32xf32>
      %34 = vector.broadcast %19 : vector<16x1xf32> to vector<16x32xf32>
      %35 = arith.subf %15, %34 : vector<16x32xf32>
      %36 = arith.mulf %35, %33 : vector<16x32xf32>
      %c0_14 = arith.constant 0 : index
      %c0_15 = arith.constant 0 : index
      %37 = vector.load %arg6[%c0_14, %c0_15] : memref<1x32xf32, #tpu.memory_space<vmem>>, vector<1x32xf32>
      %38 = vector.broadcast %37 : vector<1x32xf32> to vector<16x32xf32>
      %39 = arith.addf %36, %38 : vector<16x32xf32>
      %c0_16 = arith.constant 0 : index
      %c0_17 = arith.constant 0 : index
      %40 = vector.load %arg7[%c0_16, %c0_17] : memref<16x32xf32, #tpu.memory_space<vmem>>, vector<16x32xf32>
      tpu.vector_store %arg7[%c0_16, %c0_17], %39 {strides = array<i32>} : memref<16x32xf32, #tpu.memory_space<vmem>>, vector<16x32xf32>,
    } else {
    }
    return
  }
  func.func @transform_0(%arg0: i32) -> (i32, i32) {
    %c0_i32 = arith.constant 0 : i32
    %0 = arith.minsi %arg0, %c0_i32 : i32
    %c0_i32_0 = arith.constant 0 : i32
    %c0_i32_1 = arith.constant 0 : i32
    return %0, %c0_i32_0 : i32, i32
  }
  func.func @transform_1(%arg0: i32) -> (i32, i32) {
    %c0_i32 = arith.constant 0 : i32
    %c0_i32_0 = arith.constant 0 : i32
    %c0_i32_1 = arith.constant 0 : i32
    return %c0_i32, %c0_i32_0 : i32, i32
  }
  func.func @transform_2(%arg0: i32) -> (i32, i32) {
    %c0_i32 = arith.constant 0 : i32
    %c0_i32_0 = arith.constant 0 : i32
    %c0_i32_1 = arith.constant 0 : i32
    return %c0_i32, %c0_i32_0 : i32, i32
  }
  func.func @transform_3(%arg0: i32) -> (i32, i32) {
    %c1_i32 = arith.constant 1 : i32
    %0 = arith.subi %arg0, %c1_i32 : i32
    %c0_i32 = arith.constant 0 : i32
    %1 = arith.maxsi %0, %c0_i32 : i32
    %c0_i32_0 = arith.constant 0 : i32
    %c0_i32_1 = arith.constant 0 : i32
    return %1, %c0_i32_0 : i32, i32
  }
  func.func @transform_4(%arg0: i32) -> (i32, i32) {
    %c0_i32 = arith.constant 0 : i32
    %c0_i32_0 = arith.constant 0 : i32
    %c0_i32_1 = arith.constant 0 : i32
    return %c0_i32, %c0_i32_0 : i32, i32
  }
  func.func @transform_5(%arg0: i32) -> (i32, i32) {
    %c0_i32 = arith.constant 0 : i32
    %c0_i32_0 = arith.constant 0 : i32
    %c0_i32_1 = arith.constant 0 : i32
    return %c0_i32, %c0_i32_0 : i32, i32
  }
  func.func @transform_6(%arg0: i32) -> (i32, i32) {
    %c1_i32 = arith.constant 1 : i32
    %0 = arith.subi %arg0, %c1_i32 : i32
    %c0_i32 = arith.constant 0 : i32
    %1 = arith.maxsi %0, %c0_i32 : i32
    %c0_i32_0 = arith.constant 0 : i32
    %c0_i32_1 = arith.constant 0 : i32
    return %1, %c0_i32_0 : i32, i32
  }
}

</mosaic_0001>

<llo_original>
// kernel: tpu_custom_call.1
$region0: #{tpu_custom_call.1}
  #allocation0 [shape = 'u32[]', space=smem, size = 0x4, offset = 0x4, fixed_abs, tag = 'smem constant byte address 0x4 - core index']
  #allocation1 [shape = 'u32[144,128]{1,0:T(1,128)}', space=vmem, size = 0x12000, scoped, tag = 'internal scratch']
  #allocation2 [shape = 'f32[2,16,32]{2,1,0:T(8,128)}', space=vmem, size = 0x4000, scoped, tag = 'scratch operand']
  %s0 = inlined_call_operand.hbm [shape: f32[16,32], index: 0, kind: input, shape index: {}]
  %s1 = inlined_call_operand.hbm [shape: f32[32,32], index: 1, kind: input, shape index: {}]
  %s2 = inlined_call_operand.vmem [shape: f32[1,32], index: 2, kind: input, shape index: {}]
  %s3 = inlined_call_operand.hbm [shape: f32[16,32], index: 3, kind: input, shape index: {}]
  %s4 = inlined_call_operand.vmem [shape: f32[1,32], index: 4, kind: input, shape index: {}]
  %s5 = inlined_call_operand.vmem [shape: f32[1,32], index: 5, kind: input, shape index: {}]
  %s6 = inlined_call_operand.hbm [shape: f32[16,32], index: 6, kind: output, shape index: {}]
  %s7 = sld [smem:[#allocation0]]
  $region85: #{tpu_custom_call.1} parent=0
    _
  %s9 = ssub.s32 1, %s7
  %s10 = scalar_select 0, %s9, %s7
  $region1: #{tpu_custom_call.1} parent=0
    #allocation3 [shape = 'u8[16384]{0}', space=vmem, size = 0x4000, scoped, tag = 'input window, operand 0']
    #allocation4 [shape = 's32[2]{0}', space=sflag, size = 0x8, scoped, tag = 'scoped memory for tpu_custom_call.1']
    #allocation5 [shape = 's32[2]{0}', space=sflag, size = 0x8, scoped, tag = 'scoped memory for tpu_custom_call.1']
    #allocation6 [shape = 'u8[16384]{0}', space=vmem, size = 0x4000, scoped, tag = 'input window, operand 1, single buffered']
    #allocation7 [shape = 's32[1]{0}', space=sflag, size = 0x4, scoped, tag = 'scoped memory for tpu_custom_call.1']
    #allocation8 [shape = 'u8[16384]{0}', space=vmem, size = 0x4000, scoped, tag = 'input window, operand 3']
    #allocation9 [shape = 'u8[16384]{0}', space=vmem, size = 0x4000, scoped, tag = 'output window, operand 0']
    %11 = vsyncpa [#allocation4], 0
    %s12 = scalar_lea.sflag [#allocation4], 1
    %13 = vsyncpa %s12, 0
    %14 = vsyncpa [#allocation7], 0
    %15 = vsyncpa [#allocation5], 0
    %s16 = scalar_lea.sflag [#allocation5], 1
    %17 = vsyncpa %s16, 0
    loop: start=0, step=1, limit=4
    $region2: #{tpu_custom_call.1} parent=1 // loop_pre_header
      _
    $region3: #{tpu_custom_call.1} parent=1 // loop_header
      %s19 = sphi 0, %s23
      %p20 = scmp.ge.s32.totalorder %s19, 4
      %s33 = sphi 0, %s35
      %s36 = sphi 0, %s33
      %s37 = sphi 0, %s36
      %s53 = sphi 0, %s37
      %s57 = sphi 0, %s57
      %s59 = sphi 0, %s57
      %s60 = sphi 0, %s59
      %s74 = sphi 0, %s60
      %s78 = sphi 0, %s78
      %s80 = sphi 0, %s78
      %s81 = sphi 0, %s80
      %s95 = sphi 0, %s81
      %s107 = sphi 0, %s109
      %s110 = sphi 0, %s107
      %s111 = sphi 0, %s110
      %s127 = sphi 0, %s111
      %s131 = sphi 0, %s131
      %s133 = sphi 0, %s131
      %s134 = sphi 0, %s133
      %s148 = sphi 0, %s134
      %s152 = sphi 0, %s152
      %s154 = sphi 0, %s152
      %s155 = sphi 0, %s154
      %s169 = sphi 0, %s155
      %s181 = sphi 0, %s183
      %s184 = sphi 0, %s181
      %s185 = sphi 0, %s184
      %s201 = sphi 0, %s185
    $region4: #{tpu_custom_call.1} parent=1 // loop_header_branch
      %22 = sbr.rel (%p20) target = $region8
    $region5: #{tpu_custom_call.1} parent=1 // loop_body
      %s24 = ssub.s32 %s19, 1
      %s25 = ssub.s32 %s19, 2
      %s26 = sadd.s32 %s19, 1
      %p27 = scmp.lt.s32.totalorder %s19, 0
      %s28 = scalar_select %p27, %s19, 0
      %p29 = scmp.lt.s32.totalorder %s26, 0
      %s30 = scalar_select %p29, %s26, 0
      %s31 = ssub.s32 %s28, %s30
      %p32 = scmp.eq.s32.totalorder %s31, 0
      %s34 = sadd.s32 %s33, 1
      %s35 = scalar_select %p32, %s33, %s34
      %p38 = pneg %p32
      %p39 = scmp.eq.s32.totalorder %s19, 1
      %p40 = por %p38, %p39
      %p41 = scmp.ne.s32.totalorder %s33, %s36
      %p42 = scmp.eq.s32.totalorder %s19, 0
      %p43 = por %p41, %p42
      %p44 = scmp.ne.s32.totalorder %s33, %s36
      %p45 = scmp.eq.s32.totalorder %s24, 1
      %p46 = por %p44, %p45
      %p47 = scmp.ne.s32.totalorder %s36, %s37
      %p48 = scmp.eq.s32.totalorder %s24, 0
      %p49 = por %p47, %p48
      %p50 = scmp.ne.s32.totalorder %s36, %s37
      %p51 = scmp.eq.s32.totalorder %s25, 1
      %p52 = por %p50, %p51
      %p54 = scmp.ne.s32.totalorder %s37, %s53
      %p55 = scmp.eq.s32.totalorder %s25, 0
      %p56 = por %p54, %p55
      %s58 = sadd.s32 %s57, 1
      %p61 = scmp.eq.s32.totalorder %s19, 1
      %p62 = scmp.ne.s32.totalorder %s57, %s59
      %p63 = scmp.eq.s32.totalorder %s19, 0
      %p64 = por %p62, %p63
      %p65 = scmp.ne.s32.totalorder %s57, %s59
      %p66 = scmp.eq.s32.totalorder %s24, 1
      %p67 = por %p65, %p66
      %p68 = scmp.ne.s32.totalorder %s59, %s60
      %p69 = scmp.eq.s32.totalorder %s24, 0
      %p70 = por %p68, %p69
      %p71 = scmp.ne.s32.totalorder %s59, %s60
      %p72 = scmp.eq.s32.totalorder %s25, 1
      %p73 = por %p71, %p72
      %p75 = scmp.ne.s32.totalorder %s60, %s74
      %p76 = scmp.eq.s32.totalorder %s25, 0
      %p77 = por %p75, %p76
      %s79 = sadd.s32 %s78, 1
      %p82 = scmp.eq.s32.totalorder %s19, 1
      %p83 = scmp.ne.s32.totalorder %s78, %s80
      %p84 = scmp.eq.s32.totalorder %s19, 0
      %p85 = por %p83, %p84
      %p86 = scmp.ne.s32.totalorder %s78, %s80
      %p87 = scmp.eq.s32.totalorder %s24, 1
      %p88 = por %p86, %p87
      %p89 = scmp.ne.s32.totalorder %s80, %s81
      %p90 = scmp.eq.s32.totalorder %s24, 0
      %p91 = por %p89, %p90
      %p92 = scmp.ne.s32.totalorder %s80, %s81
      %p93 = scmp.eq.s32.totalorder %s25, 1
      %p94 = por %p92, %p93
      %p96 = scmp.ne.s32.totalorder %s81, %s95
      %p97 = scmp.eq.s32.totalorder %s25, 0
      %p98 = por %p96, %p97
      %s99 = ssub.s32 %s19, 1
      %p100 = scmp.gt.s32.totalorder %s99, 0
      %s101 = scalar_select %p100, %s99, 0
      %s102 = ssub.s32 %s26, 1
      %p103 = scmp.gt.s32.totalorder %s102, 0
      %s104 = scalar_select %p103, %s102, 0
      %s105 = ssub.s32 %s101, %s104
      %p106 = scmp.eq.s32.totalorder %s105, 0
      %s108 = sadd.s32 %s107, 1
      %s109 = scalar_select %p106, %s107, %s108
      %p112 = pneg %p106
      %p113 = scmp.eq.s32.totalorder %s19, 1
      %p114 = por %p112, %p113
      %p115 = scmp.ne.s32.totalorder %s107, %s110
      %p116 = scmp.eq.s32.totalorder %s19, 0
      %p117 = por %p115, %p116
      %p118 = scmp.ne.s32.totalorder %s107, %s110
      %p119 = scmp.eq.s32.totalorder %s24, 1
      %p120 = por %p118, %p119
      %p121 = scmp.ne.s32.totalorder %s110, %s111
      %p122 = scmp.eq.s32.totalorder %s24, 0
      %p123 = por %p121, %p122
      %p124 = scmp.ne.s32.totalorder %s110, %s111
      %p125 = scmp.eq.s32.totalorder %s25, 1
      %p126 = por %p124, %p125
      %p128 = scmp.ne.s32.totalorder %s111, %s127
      %p129 = scmp.eq.s32.totalorder %s25, 0
      %p130 = por %p128, %p129
      %s132 = sadd.s32 %s131, 1
      %p135 = scmp.eq.s32.totalorder %s19, 1
      %p136 = scmp.ne.s32.totalorder %s131, %s133
      %p137 = scmp.eq.s32.totalorder %s19, 0
      %p138 = por %p136, %p137
      %p139 = scmp.ne.s32.totalorder %s131, %s133
      %p140 = scmp.eq.s32.totalorder %s24, 1
      %p141 = por %p139, %p140
      %p142 = scmp.ne.s32.totalorder %s133, %s134
      %p143 = scmp.eq.s32.totalorder %s24, 0
      %p144 = por %p142, %p143
      %p145 = scmp.ne.s32.totalorder %s133, %s134
      %p146 = scmp.eq.s32.totalorder %s25, 1
      %p147 = por %p145, %p146
      %p149 = scmp.ne.s32.totalorder %s134, %s148
      %p150 = scmp.eq.s32.totalorder %s25, 0
      %p151 = por %p149, %p150
      %s153 = sadd.s32 %s152, 1
      %p156 = scmp.eq.s32.totalorder %s19, 1
      %p157 = scmp.ne.s32.totalorder %s152, %s154
      %p158 = scmp.eq.s32.totalorder %s19, 0
      %p159 = por %p157, %p158
      %p160 = scmp.ne.s32.totalorder %s152, %s154
      %p161 = scmp.eq.s32.totalorder %s24, 1
      %p162 = por %p160, %p161
      %p163 = scmp.ne.s32.totalorder %s154, %s155
      %p164 = scmp.eq.s32.totalorder %s24, 0
      %p165 = por %p163, %p164
      %p166 = scmp.ne.s32.totalorder %s154, %s155
      %p167 = scmp.eq.s32.totalorder %s25, 1
      %p168 = por %p166, %p167
      %p170 = scmp.ne.s32.totalorder %s155, %s169
      %p171 = scmp.eq.s32.totalorder %s25, 0
      %p172 = por %p170, %p171
      %s173 = ssub.s32 %s19, 1
      %p174 = scmp.gt.s32.totalorder %s173, 0
      %s175 = scalar_select %p174, %s173, 0
      %s176 = ssub.s32 %s26, 1
      %p177 = scmp.gt.s32.totalorder %s176, 0
      %s178 = scalar_select %p177, %s176, 0
      %s179 = ssub.s32 %s175, %s178
      %p180 = scmp.eq.s32.totalorder %s179, 0
      %s182 = sadd.s32 %s181, 1
      %s183 = scalar_select %p180, %s181, %s182
      %p186 = pneg %p180
      %p187 = scmp.eq.s32.totalorder %s19, 1
      %p188 = por %p186, %p187
      %p189 = scmp.ne.s32.totalorder %s181, %s184
      %p190 = scmp.eq.s32.totalorder %s19, 0
      %p191 = por %p189, %p190
      %p192 = scmp.ne.s32.totalorder %s181, %s184
      %p193 = scmp.eq.s32.totalorder %s24, 1
      %p194 = por %p192, %p193
      %p195 = scmp.ne.s32.totalorder %s184, %s185
      %p196 = scmp.eq.s32.totalorder %s24, 0
      %p197 = por %p195, %p196
      %p198 = scmp.ne.s32.totalorder %s184, %s185
      %p199 = scmp.eq.s32.totalorder %s25, 1
      %p200 = por %p198, %p199
      %p202 = scmp.ne.s32.totalorder %s185, %s201
      %p203 = scmp.eq.s32.totalorder %s25, 0
      %p204 = por %p202, %p203
      %p205 = scmp.le.s32.totalorder 1, %s19
      %p206 = scmp.lt.s32.totalorder %s19, 3
      %p207 = pnand %p205, %p206
      %p208 = pneg %p207
      // Predicated region
      $region9: #{tpu_custom_call.1} parent=5 // pred_check
        _
      $region10: #{tpu_custom_call.1} parent=5 // pred_check_branch
        %210 = sbr.rel (%p207) target = $region12
      $region11: #{tpu_custom_call.1} parent=5 // pred_region
        %s211 = ssub.s32 %s19, 1
        // Predicated region
        $region13: #{tpu_custom_call.1} parent=11 // pred_check
          %p212 = pneg %p70
        $region14: #{tpu_custom_call.1} parent=11 // pred_check_branch
          %214 = sbr.rel (%p212) target = $region16
        $region15: #{tpu_custom_call.1} parent=11 // pred_region
          %s216 = ssub.s32 512, 512
          %217 = vsyncadd [#allocation7], %s216
          %s218 = sshll.u32 [#allocation6], 4
          %s219 = int_to_ptr.vmem [resolvable:$true] %s218
          %224 = dma.hbm_to_vmem [thread:$0]  %s1, 512, %s219, [#allocation7], 128, 128, 8
        $region16: #{tpu_custom_call.1} parent=11 // pred_fallthru
          _
        // Predicated region
        $region17: #{tpu_custom_call.1} parent=11 // pred_check
          %p225 = pneg %p91
        $region18: #{tpu_custom_call.1} parent=11 // pred_check_branch
          %227 = sbr.rel (%p225) target = $region20
        $region19: #{tpu_custom_call.1} parent=11 // pred_region
          _
        $region20: #{tpu_custom_call.1} parent=11 // pred_fallthru
          _
        // Predicated region
        $region21: #{tpu_custom_call.1} parent=11 // pred_check
          %p228 = pneg %p144
        $region22: #{tpu_custom_call.1} parent=11 // pred_check_branch
          %230 = sbr.rel (%p228) target = $region24
        $region23: #{tpu_custom_call.1} parent=11 // pred_region
          _
        $region24: #{tpu_custom_call.1} parent=11 // pred_fallthru
          _
        // Predicated region
        $region25: #{tpu_custom_call.1} parent=11 // pred_check
          %p231 = pneg %p165
        $region26: #{tpu_custom_call.1} parent=11 // pred_check_branch
          %233 = sbr.rel (%p231) target = $region28
        $region27: #{tpu_custom_call.1} parent=11 // pred_region
          _
        $region28: #{tpu_custom_call.1} parent=11 // pred_fallthru
          _
      $region12: #{tpu_custom_call.1} parent=5 // pred_fallthru
        _
      %p234 = scmp.lt.s32.totalorder %s19, 2
      // Predicated region
      $region29: #{tpu_custom_call.1} parent=5 // pred_check
        %p235 = pneg %p234
      $region30: #{tpu_custom_call.1} parent=5 // pred_check_branch
        %237 = sbr.rel (%p235) target = $region32
      $region31: #{tpu_custom_call.1} parent=5 // pred_region
        // Predicated region
        $region33: #{tpu_custom_call.1} parent=31 // pred_check
          %p238 = pneg %p43
        $region34: #{tpu_custom_call.1} parent=31 // pred_check_branch
          %240 = sbr.rel (%p238) target = $region36
        $region35: #{tpu_custom_call.1} parent=31 // pred_region
          %s241 = sand.u32 %s19, 1
          %s242 = scalar_lea.sflag [#allocation4], %s241
          %s243 = sand.u32 %s33, 1
          %s244 = smul.addr %s243, 16
          %s245 = scalar_lea.vmem [#allocation3], %s244
          %p246 = scmp.lt.s32.totalorder %s19, 0
          %s247 = scalar_select %p246, %s19, 0
          %s248 = smul.u32 2, %s247
          %s250 = ssub.s32 256, 256
          %251 = vsyncadd %s242, %s250
          %s252 = smul.addr %s248, 128
          %s253 = scalar_lea.hbm %s0, %s252
          %s254 = sshll.u32 %s245, 4
          %s255 = int_to_ptr.vmem [resolvable:$true] %s254
          %260 = dma.hbm_to_vmem [thread:$0]  %s253, 256, %s255, %s242, 128, 128, 8
        $region36: #{tpu_custom_call.1} parent=31 // pred_fallthru
          _
        // Predicated region
        $region37: #{tpu_custom_call.1} parent=31 // pred_check
          %p261 = pneg %p117
        $region38: #{tpu_custom_call.1} parent=31 // pred_check_branch
          %263 = sbr.rel (%p261) target = $region40
        $region39: #{tpu_custom_call.1} parent=31 // pred_region
          %s264 = sand.u32 %s19, 1
          %s265 = scalar_lea.sflag [#allocation4], %s264
          %s266 = sand.u32 %s107, 1
          %s267 = smul.addr %s266, 16
          %s268 = scalar_lea.vmem [#allocation8], %s267
          %s269 = ssub.s32 %s19, 1
          %p270 = scmp.gt.s32.totalorder %s269, 0
          %s271 = scalar_select %p270, %s269, 0
          %s272 = smul.u32 2, %s271
          %s274 = ssub.s32 256, 256
          %275 = vsyncadd %s265, %s274
          %s276 = smul.addr %s272, 128
          %s277 = scalar_lea.hbm %s3, %s276
          %s278 = sshll.u32 %s268, 4
          %s279 = int_to_ptr.vmem [resolvable:$true] %s278
          %284 = dma.hbm_to_vmem [thread:$0]  %s277, 256, %s279, %s265, 128, 128, 8
        $region40: #{tpu_custom_call.1} parent=31 // pred_fallthru
          _
      $region32: #{tpu_custom_call.1} parent=5 // pred_fallthru
        _
      %p285 = scmp.le.s32.totalorder 1, %s19
      %p286 = scmp.lt.s32.totalorder %s19, 3
      %p287 = pnand %p285, %p286
      %p288 = pneg %p287
      // Predicated region
      $region41: #{tpu_custom_call.1} parent=5 // pred_check
        _
      $region42: #{tpu_custom_call.1} parent=5 // pred_check_branch
        %290 = sbr.rel (%p287) target = $region44
      $region43: #{tpu_custom_call.1} parent=5 // pred_region
        %s291 = ssub.s32 %s19, 1
        %s292 = sand.u32 %s24, 1
        %s293 = scalar_lea.sflag [#allocation4], %s292
        %s294 = sand.u32 %s36, 1
        %s295 = smul.addr %s294, 16
        %s296 = scalar_lea.vmem [#allocation3], %s295
        // Predicated region
        $region45: #{tpu_custom_call.1} parent=43 // pred_check
          %p297 = pneg %p49
        $region46: #{tpu_custom_call.1} parent=43 // pred_check_branch
          %299 = sbr.rel (%p297) target = $region48
        $region47: #{tpu_custom_call.1} parent=43 // pred_region
          %300 = dma.done %s293, 256
        $region48: #{tpu_custom_call.1} parent=43 // pred_fallthru
          _
        // Predicated region
        $region49: #{tpu_custom_call.1} parent=43 // pred_check
          %p301 = pneg %p70
        $region50: #{tpu_custom_call.1} parent=43 // pred_check_branch
          %303 = sbr.rel (%p301) target = $region52
        $region51: #{tpu_custom_call.1} parent=43 // pred_region
          %304 = dma.done [#allocation7], 512
        $region52: #{tpu_custom_call.1} parent=43 // pred_fallthru
          _
        %s305 = sand.u32 %s24, 1
        %s306 = scalar_lea.sflag [#allocation4], %s305
        %s307 = sand.u32 %s110, 1
        %s308 = smul.addr %s307, 16
        %s309 = scalar_lea.vmem [#allocation8], %s308
        // Predicated region
        $region53: #{tpu_custom_call.1} parent=43 // pred_check
          %p310 = pneg %p123
        $region54: #{tpu_custom_call.1} parent=43 // pred_check_branch
          %312 = sbr.rel (%p310) target = $region56
        $region55: #{tpu_custom_call.1} parent=43 // pred_region
          %313 = dma.done %s306, 256
        $region56: #{tpu_custom_call.1} parent=43 // pred_fallthru
          _
        %s314 = sand.u32 %s24, 1
        %s315 = scalar_lea.sflag [#allocation4], %s314
        %s316 = sand.u32 %s36, 1
        %s317 = smul.addr %s316, 16
        %s318 = scalar_lea.vmem [#allocation3], %s317
        %p319 = pneg %p49
        %p320 = pneg %p46
        %p321 = pneg %p70
        %p322 = pneg %p67
        %p323 = pneg %p91
        %p324 = pneg %p88
        %s325 = sand.u32 %s24, 1
        %s326 = scalar_lea.sflag [#allocation4], %s325
        %s327 = sand.u32 %s110, 1
        %s328 = smul.addr %s327, 16
        %s329 = scalar_lea.vmem [#allocation8], %s328
        %p330 = pneg %p123
        %p331 = pneg %p120
        %p332 = pneg %p144
        %p333 = pneg %p141
        %p334 = pneg %p165
        %p335 = pneg %p162
        %p336 = pneg %p197
        %p337 = pneg %p194
        %s338 = sand.u32 %s184, 1
        %s339 = scalar_lea.sflag [#allocation5], %s338
        %s340 = sand.u32 %s184, 1
        %s341 = smul.addr %s340, 16
        %s342 = scalar_lea.vmem [#allocation9], %s341
        %p343 = scmp.lt.s32.totalorder %s24, 0
        %s344 = scalar_select %p343, %s24, 0
        %s345 = smul.u32 2, %s344
        %s346 = ssub.s32 %s24, 1
        %p347 = scmp.gt.s32.totalorder %s346, 0
        %s348 = scalar_select %p347, %s346, 0
        %s349 = smul.u32 2, %s348
        %s350 = ssub.s32 %s24, 1
        %p351 = scmp.gt.s32.totalorder %s350, 0
        %s352 = scalar_select %p351, %s350, 0
        %s353 = smul.u32 2, %s352
        %p354 = scmp.lt.s32.totalorder %s24, 0
        %s355 = ssub.s32 0, %s24
        %s356 = scalar_select %p354, %s355, %s24
        %s357 = sand.u32 %s356, 1
        %s358 = ssub.s32 0, %s357
        %s359 = scalar_select %p354, %s358, %s357
        %s360 = ssub.s32 1, %s359
        %p361 = scmp.lt.s32.totalorder %s24, 1
        // Predicated region
        $region57: #{tpu_custom_call.1} parent=43 // pred_check
          %p362 = pneg %p361
        $region58: #{tpu_custom_call.1} parent=43 // pred_check_branch
          %364 = sbr.rel (%p362) target = $region60
        $region59: #{tpu_custom_call.1} parent=43 // pred_region
          %v365 = vld [vmem:[%s296] sm:$0xff]
          %v366 = vld [vmem:[%s296 + $0x8] sm:$0xff]
          %v367 = vld [vmem:[#allocation6] sm:$0xff]
          %v368 = vld [vmem:[#allocation6 + $0x8] sm:$0xff]
          %v369 = vld [vmem:[#allocation6 + $0x10] sm:$0xff]
          %v370 = vld [vmem:[#allocation6 + $0x18] sm:$0xff]
          %vm371 = vcmask 261120
          %v373 = vsel %vm371, %v365, 0
          %v376 = vsel %vm371, %v366, 0
          %378 = vmatprep.subr.mxu0 0.0
          %379 = vmatpush1.msra.mxu0 %v367
          %380 = vmatprep.subr.mxu0 0.0
          %381 = vmatpush1.msra.mxu0 %v368
          %382 = vmatprep.subr.mxu0 0.0
          %383 = vmatpush1.msra.mxu0 %v369
          %384 = vmatprep.subr.mxu0 0.0
          %385 = vmatpush1.msra.mxu0 %v370
          %386 = vmatprep.subr.mxu0 0.0
          %387 = vmatpush1.msra.mxu0 0.0
          %388 = vmatprep.subr.mxu0 0.0
          %389 = vmatpush1.msra.mxu0 0.0
          %390 = vmatprep.subr.mxu0 0.0
          %391 = vmatpush1.msra.mxu0 0.0
          %392 = vmatprep.subr.mxu0 0.0
          %393 = vmatpush1.msra.mxu0 0.0
          %394 = vmatprep.subr.mxu0 0.0
          %395 = vmatpush1.msra.mxu0 0.0
          %396 = vmatprep.subr.mxu0 0.0
          %397 = vmatpush1.msra.mxu0 0.0
          %398 = vmatprep.subr.mxu0 0.0
          %399 = vmatpush1.msra.mxu0 0.0
          %400 = vmatprep.subr.mxu0 0.0
          %401 = vmatpush1.msra.mxu0 0.0
          %402 = vmatprep.subr.mxu0 0.0
          %403 = vmatpush1.msra.mxu0 0.0
          %404 = vmatprep.subr.mxu0 0.0
          %405 = vmatpush1.msra.mxu0 0.0
          %406 = vmatprep.subr.mxu0 0.0
          %407 = vmatpush1.msra.mxu0 0.0
          %408 = vmatprep.subr.mxu0 0.0
          %409 = vmatpush1.msra.mxu0 0.0
          %410 = vmatprep.subr.mxu0 0.0
          %411 = vmatpush1.msra.mxu0 0.0
          %412 = vmatprep.subr.mxu0 0.0
          %413 = vmatpush1.msra.mxu0 0.0
          %414 = vmatprep.subr.mxu0 0.0
          %415 = vmatpush1.msra.mxu0 0.0
          %416 = vmatprep.subr.mxu0 0.0
          %417 = vmatpush1.msra.mxu0 0.0
          %418 = vmatprep.subr.mxu0 0.0
          %419 = vmatpush1.msra.mxu0 0.0
          %420 = vmatprep.subr.mxu0 0.0
          %421 = vmatpush1.msra.mxu0 0.0
          %422 = vmatprep.subr.mxu0 0.0
          %423 = vmatpush1.msra.mxu0 0.0
          %424 = vmatprep.subr.mxu0 0.0
          %425 = vmatpush1.msra.mxu0 0.0
          %426 = vmatprep.subr.mxu0 0.0
          %427 = vmatpush1.msra.mxu0 0.0
          %428 = vmatprep.subr.mxu0 0.0
          %429 = vmatpush1.msra.mxu0 0.0
          %430 = vmatprep.subr.mxu0 0.0
          %431 = vmatpush1.msra.mxu0 0.0
          %432 = vmatprep.subr.mxu0 0.0
          %433 = vmatpush1.msra.mxu0 0.0
          %434 = vmatprep.subr.mxu0 0.0
          %435 = vmatpush1.msra.mxu0 0.0
          %436 = vmatprep.subr.mxu0 0.0
          %437 = vmatpush1.msra.mxu0 0.0
          %438 = vmatprep.subr.mxu0 0.0
          %439 = vmatpush1.msra.mxu0 0.0
          %440 = vmatprep.subr.mxu0 0.0
          %441 = vmatpush1.msra.mxu0 0.0
          %442 = vmatprep.mubr.f32.mxu0 0.0
          %443 = vmatmul.mubr.f32.gmra.mrb[0].mxu0 %v373
          %v444 = vpop.f32.mrb[0].mxu0
          %v445 = vadd.f32 0.0, %v444
          %v446 = vpop.f32.mrb[0].mxu0
          %447 = vmatprep.mubr.f32.mxu0 0.0
          %448 = vmatmul.mubr.f32.gmra.mrb[0].mxu0 %v376
          %v449 = vpop.f32.mrb[0].mxu0
          %v450 = vadd.f32 0.0, %v449
          %v451 = vpop.f32.mrb[0].mxu0
          %452 = vdwg.mxu0
          %p453 = scmp.eq.s32.totalorder %s359, 0
          // Predicated region
          $region61: #{tpu_custom_call.1} parent=59 // pred_check
            %p454 = pneg %p453
          $region62: #{tpu_custom_call.1} parent=59 // pred_check_branch
            %456 = sbr.rel (%p454) target = $region64
          $region63: #{tpu_custom_call.1} parent=59 // pred_region
            %457 = vst.msk [vmem:[#allocation2] sm:$0xff] %vm371, %v445
            %458 = vst.msk [vmem:[#allocation2 + $0x8] sm:$0xff] %vm371, %v450
          $region64: #{tpu_custom_call.1} parent=59 // pred_fallthru
            _
          %p459 = scmp.eq.s32.totalorder %s359, 1
          // Predicated region
          $region65: #{tpu_custom_call.1} parent=59 // pred_check
            %p460 = pneg %p459
          $region66: #{tpu_custom_call.1} parent=59 // pred_check_branch
            %462 = sbr.rel (%p460) target = $region68
          $region67: #{tpu_custom_call.1} parent=59 // pred_region
            %s463 = scalar_lea.vmem [#allocation2], 16
            %464 = vst.msk [vmem:[%s463] sm:$0xff] %vm371, %v445
            %465 = vst.msk [vmem:[%s463 + $0x8] sm:$0xff] %vm371, %v450
          $region68: #{tpu_custom_call.1} parent=59 // pred_fallthru
            _
        $region60: #{tpu_custom_call.1} parent=43 // pred_fallthru
          _
        %p466 = scmp.gt.s32.totalorder %s24, 0
        // Predicated region
        $region69: #{tpu_custom_call.1} parent=43 // pred_check
          %p467 = pneg %p466
        $region70: #{tpu_custom_call.1} parent=43 // pred_check_branch
          %469 = sbr.rel (%p467) target = $region72
        $region71: #{tpu_custom_call.1} parent=43 // pred_region
          %s470 = smul.u32 %s360, 16
          %s471 = scalar_lea.vmem [#allocation2], %s470
          %v472 = vld [vmem:[%s471] sm:$0xff]
          %v473 = vld [vmem:[%s471 + $0x8] sm:$0xff]
          %v474 = vld [vmem:[%s2] sm:$0x1]
          %v476 = vlaneseq
          %v477 = vshrl.u32 %v476, 7
          %v478 = vsub.s32 0, %v477
          %v479 = vrot.slane %v474, %v478
          %v481 = vadd.f32 %v472, %v479
          %v482 = vadd.f32 %v473, %v479
          %v483 = vld [vmem:[%s309] sm:$0xff]
          %v484 = vld [vmem:[%s309 + $0x8] sm:$0xff]
          %v485 = vadd.f32 %v481, %v483
          %v486 = vadd.f32 %v482, %v484
          %vm487 = vcmask 261120
          %v488 = vsel %vm487, %v485, 0.0
          %489 = vadd.xlane.f32.xlu0 %v488
          %v490 = vpop.xlane.xlu0 %489
          %v491 = vsel %vm487, %v486, 0.0
          %492 = vadd.xlane.f32.xlu0 %v491
          %v493 = vpop.xlane.xlu0 %492
          %v494 = vrcp.pop 32.0
          %v495 = vmul.f32 %v490, %v494
          %v496 = vmul.f32 %v493, %v494
          %v497 = vmul.f32 %v485, %v485
          %v498 = vmul.f32 %v486, %v486
          %v499 = vsel %vm487, %v497, 0.0
          %500 = vadd.xlane.f32.xlu0 %v499
          %v501 = vpop.xlane.xlu0 %500
          %v502 = vsel %vm487, %v498, 0.0
          %503 = vadd.xlane.f32.xlu0 %v502
          %v504 = vpop.xlane.xlu0 %503
          %v505 = vmul.f32 %v501, %v494
          %v506 = vmul.f32 %v504, %v494
          %v507 = vmul.f32 %v495, %v495
          %v508 = vmul.f32 %v496, %v496
          %v509 = vsub.f32 %v505, %v507
          %v510 = vsub.f32 %v506, %v508
          %v511 = vadd.f32 %v509, 1e-12
          %v512 = vadd.f32 %v510, 1e-12
          %v513 = vrsqrt.pop %v511
          %v514 = vrsqrt.pop %v512
          %v515 = vld [vmem:[%s4] sm:$0x1]
          %v517 = vlaneseq
          %v518 = vshrl.u32 %v517, 7
          %v519 = vsub.s32 0, %v518
          %v520 = vrot.slane %v515, %v519
          %v522 = vmul.f32 %v520, %v513
          %v523 = vmul.f32 %v520, %v514
          %v524 = vsub.f32 %v485, %v495
          %v525 = vsub.f32 %v486, %v496
          %v526 = vmul.f32 %v524, %v522
          %v527 = vmul.f32 %v525, %v523
          %v528 = vld [vmem:[%s5] sm:$0x1]
          %v530 = vlaneseq
          %v531 = vshrl.u32 %v530, 7
          %v532 = vsub.s32 0, %v531
          %v533 = vrot.slane %v528, %v532
          %v535 = vadd.f32 %v526, %v533
          %v536 = vadd.f32 %v527, %v533
          %537 = vst.msk [vmem:[%s342] sm:$0xff] %vm487, %v535
          %538 = vst.msk [vmem:[%s342 + $0x8] sm:$0xff] %vm487, %v536
        $region72: #{tpu_custom_call.1} parent=43 // pred_fallthru
          _
        %s539 = sand.u32 %s184, 1
        %s540 = scalar_lea.sflag [#allocation5], %s539
        %s541 = sand.u32 %s184, 1
        %s542 = smul.addr %s541, 16
        %s543 = scalar_lea.vmem [#allocation9], %s542
        // Predicated region
        $region73: #{tpu_custom_call.1} parent=43 // pred_check
          %p544 = pneg %p194
        $region74: #{tpu_custom_call.1} parent=43 // pred_check_branch
          %546 = sbr.rel (%p544) target = $region76
        $region75: #{tpu_custom_call.1} parent=43 // pred_region
          %s547 = ssub.s32 %s24, 1
          %p548 = scmp.gt.s32.totalorder %s547, 0
          %s549 = scalar_select %p548, %s547, 0
          %s550 = smul.u32 2, %s549
          %s552 = ssub.s32 256, 256
          %553 = vsyncadd %s540, %s552
          %s554 = smul.addr %s550, 128
          %s555 = scalar_lea.hbm %s6, %s554
          %s556 = sshll.u32 %s543, 4
          %s557 = int_to_ptr.vmem [resolvable:$true] %s556
          %562 = dma.vmem_to_hbm [thread:$0]  %s557, 256, %s555, %s540, 128, 128, 8
        $region76: #{tpu_custom_call.1} parent=43 // pred_fallthru
          _
      $region44: #{tpu_custom_call.1} parent=5 // pred_fallthru
        _
      %p563 = scmp.le.s32.totalorder 2, %s19
      // Predicated region
      $region77: #{tpu_custom_call.1} parent=5 // pred_check
        %p564 = pneg %p563
      $region78: #{tpu_custom_call.1} parent=5 // pred_check_branch
        %566 = sbr.rel (%p564) target = $region80
      $region79: #{tpu_custom_call.1} parent=5 // pred_region
        %s567 = ssub.s32 %s19, 2
        // Predicated region
        $region81: #{tpu_custom_call.1} parent=79 // pred_check
          %p568 = pneg %p200
        $region82: #{tpu_custom_call.1} parent=79 // pred_check_branch
          %570 = sbr.rel (%p568) target = $region84
        $region83: #{tpu_custom_call.1} parent=79 // pred_region
          %s571 = sand.u32 %s185, 1
          %s572 = scalar_lea.sflag [#allocation5], %s571
          %s573 = sand.u32 %s185, 1
          %s574 = smul.addr %s573, 16
          %s575 = scalar_lea.vmem [#allocation9], %s574
          %576 = dma.done %s572, 256
        $region84: #{tpu_custom_call.1} parent=79 // pred_fallthru
          _
      $region80: #{tpu_custom_call.1} parent=5 // pred_fallthru
        _
    $region6: #{tpu_custom_call.1} parent=1 // loop_footer
      %s23 = sadd.s32 1, %s19
    $region7: #{tpu_custom_call.1} parent=1 // loop_footer_branch
      %18 = sbr.rel target = $region3
    $region8: #{tpu_custom_call.1} parent=1 // loop_exit
      _
    %577 = vsyncpa [#allocation4], 1
    %s578 = scalar_lea.sflag [#allocation4], 1
    %579 = vsyncpa %s578, 1
    %580 = vsyncpa [#allocation7], 1
    %581 = vsyncpa [#allocation5], 1
    %s582 = scalar_lea.sflag [#allocation5], 1
    %583 = vsyncpa %s582, 1

</llo_original>
